<compile_context>
chip_gen: v7x
topology: tpu7x:2x2x1
jax: 0.10.0
libtpu: 0.0.40
codegen_flags: <defaults>
</compile_context>

<pallas_src>
import jax
import jax.numpy as jnp
from jax.experimental import pallas as pl
from jax.experimental.pallas import tpu as pltpu


# ---------------------------------------------------------------------------
# Kernel bodies
# ---------------------------------------------------------------------------
def _ls_kernel(x_ref, g_ref, o_ref):
    # x_ref: (br, bl) activations; g_ref: (br, 1) f32 gamma -> lane broadcast.
    x = x_ref[...].astype(jnp.float32)
    o_ref[...] = (x * g_ref[...]).astype(o_ref.dtype)


def _ls_add_kernel(x_ref, g_ref, r_ref, o_ref):
    # Fused LayerScale + residual: out = x * gamma + residual (f32 compute).
    x = x_ref[...].astype(jnp.float32)
    r = r_ref[...].astype(jnp.float32)
    o_ref[...] = (x * g_ref[...] + r).astype(o_ref.dtype)


def _proj_ls_add_kernel(x_ref, w_ref, b_ref, g_ref, r_ref, o_ref):
    # Producer-fused epilogue:
    #   x_ref: (1, K, bs) activations, w_ref: (bc, K) weights,
    #   b_ref/g_ref: (bc, 1) f32 bias/gamma, r_ref/o_ref: (1, bc, bs).
    acc = jnp.dot(w_ref[...], x_ref[0], preferred_element_type=jnp.float32)
    out = (acc + b_ref[...]) * g_ref[...] + r_ref[0].astype(jnp.float32)
    o_ref[0] = out.astype(o_ref.dtype)


# ---------------------------------------------------------------------------
# Tiling helpers
# ---------------------------------------------------------------------------
def _round_up(a, m):
    return ((a + m - 1) // m) * m


def _sublane_multiple(dtype):
    # Sublane packing: 8 rows/vreg for 4-byte, 16 for 2-byte, 32 for 1-byte.
    return max(8, 32 // jnp.dtype(dtype).itemsize)


def _pick_blocks(rows, lanes, dtype, max_rows=512, max_lanes=1024):
    """Pick (row_block, lane_block). `lanes` must already be a multiple of 128."""
    sub = _sublane_multiple(dtype)
    max_rows = max(max_rows, sub)            # guard: never produce br == 0
    br = rows if rows <= max_rows else (max_rows // sub) * sub
    bl = min(lanes, max_lanes)               # 128-aligned, lane-dense stores
    # v7x megacore: guarantee >= 2 programs on a parallel axis when possible.
    if br >= rows and bl >= lanes:
        if lanes >= 2 * 128:
            bl = _round_up(lanes // 2, 128)
        elif rows >= 2 * sub:
            br = min(rows, _round_up(pl.cdiv(rows, 2), sub))
    return br, bl


def _flatten_pad_nchw(x):
    """NCHW -> (N*C, pad128(H*W)); lane axis = dense spatial axis."""
    N, C, H, W = x.shape
    hw = H * W
    hw_pad = _round_up(hw, 128)
    x2 = x.reshape(N * C, hw)
    if hw_pad != hw:
        x2 = jnp.pad(x2, ((0, 0), (0, hw_pad - hw)))
    return x2, (N, C, H, W), hw, hw_pad


def _gamma_operand_and_spec(gamma, N, C, br):
    """gamma stays float32 (accuracy at zero bandwidth cost on this HBM-bound op).

    If the row block divides C we pass gamma as (C, 1) and pick the block with a
    modular index_map (no wrapper-side jnp.tile); otherwise fall back to a tiled
    (N*C, 1) per-row scale.  Either way the (rows, lanes) broadcast happens on the
    VPU inside the kernel, never in HBM."""
    g = gamma.astype(jnp.float32)
    if C % br == 0:
        cb = C // br
        return g.reshape(C, 1), pl.BlockSpec((br, 1), lambda i, j: (i % cb, 0))
    g2 = jnp.tile(g, N).reshape(N * C, 1)
    return g2, pl.BlockSpec((br, 1), lambda i, j: (i, 0))


def _elementwise_params():
    return pltpu.CompilerParams(dimension_semantics=("parallel", "parallel"))


# ---------------------------------------------------------------------------
# Public wrappers — standalone (fallback) kernels
# ---------------------------------------------------------------------------
def layer_scale(x, gamma, *, max_rows=512, max_lanes=1024):
    """out = x * gamma[None, :, None, None]   (x: NCHW, gamma: (C,))."""
    x2, (N, C, H, W), hw, hw_pad = _flatten_pad_nchw(x)
    rows = N * C
    br, bl = _pick_blocks(rows, hw_pad, x.dtype, max_rows, max_lanes)
    g2, g_spec = _gamma_operand_and_spec(gamma, N, C, br)
    grid = (pl.cdiv(rows, br), pl.cdiv(hw_pad, bl))

    out = pl.pallas_call(
        _ls_kernel,
        out_shape=jax.ShapeDtypeStruct((rows, hw_pad), x.dtype),
        grid_spec=pltpu.PrefetchScalarGridSpec(
            num_scalar_prefetch=0,
            grid=grid,
            in_specs=[pl.BlockSpec((br, bl), lambda i, j: (i, j)), g_spec],
            out_specs=pl.BlockSpec((br, bl), lambda i, j: (i, j)),
        ),
        compiler_params=_elementwise_params(),
    )(x2, g2)
    if hw_pad != hw:
        out = out[:, :hw]
    return out.reshape(N, C, H, W)


def layer_scale_add(x, gamma, residual, *, max_rows=512, max_lanes=1024,
                    alias_residual=False):
    """Fused DiTBlock call site `self.ls1(x) + input`:
       out = x * gamma[None, :, None, None] + residual.
    With alias_residual=True the residual buffer is aliased to the output
    (valid in DiTBlock, where `input` is dead after the add)."""
    x2, (N, C, H, W), hw, hw_pad = _flatten_pad_nchw(x)
    r2 = residual.reshape(N * C, hw)
    if alias_residual:
        r2 = r2.astype(x.dtype)            # alias requires matching dtype
    if hw_pad != hw:
        r2 = jnp.pad(r2, ((0, 0), (0, hw_pad - hw)))
    rows = N * C
    br, bl = _pick_blocks(rows, hw_pad, x.dtype, max_rows, max_lanes)
    g2, g_spec = _gamma_operand_and_spec(gamma, N, C, br)
    grid = (pl.cdiv(rows, br), pl.cdiv(hw_pad, bl))

    out = pl.pallas_call(
        _ls_add_kernel,
        out_shape=jax.ShapeDtypeStruct((rows, hw_pad), x.dtype),
        grid_spec=pltpu.PrefetchScalarGridSpec(
            num_scalar_prefetch=0,
            grid=grid,
            in_specs=[
                pl.BlockSpec((br, bl), lambda i, j: (i, j)),
                g_spec,
                pl.BlockSpec((br, bl), lambda i, j: (i, j)),
            ],
            out_specs=pl.BlockSpec((br, bl), lambda i, j: (i, j)),
        ),
        compiler_params=_elementwise_params(),
        input_output_aliases=({2: 0} if alias_residual else {}),
    )(x2, g2, r2)
    if hw_pad != hw:
        out = out[:, :hw]
    return out.reshape(N, C, H, W)


# ---------------------------------------------------------------------------
# Producer-fused epilogue: 1x1 conv / per-pixel linear + LayerScale + residual
# ---------------------------------------------------------------------------
def conv1x1_ls_add(x, w, b, gamma, residual, *, max_bc=256, max_bs=1024):
    """out = (Conv2d_1x1(x; w, b)) * gamma[None, :, None, None] + residual.

    Covers both DiTBlock LayerScale sites with the FMA fused into the producing
    matmul's store:
      * attn.outProj -> ls1 -> + input      (K = channels)
      * mlp.fc2      -> ls2 -> + input      (K = 4 * channels, channel-major view)

    x: (N, K, H, W); w: (Cout, K); b, gamma: (Cout,); residual: (N, Cout, H, W).
    """
    N, K, H, W = x.shape
    Cout = w.shape[0]
    hw = H * W
    hw_pad = _round_up(hw, 128)

    x3 = x.reshape(N, K, hw)
    r3 = residual.reshape(N, Cout, hw)
    if hw_pad != hw:
        x3 = jnp.pad(x3, ((0, 0), (0, 0), (0, hw_pad - hw)))
        r3 = jnp.pad(r3, ((0, 0), (0, 0), (0, hw_pad - hw)))

    # Channel block: multiples of 8 (or full extent for odd Cout).
    bc = min(Cout, max_bc) if Cout % 8 == 0 else Cout
    # Spatial block: 128-aligned; cap the (K, bs) activation block at ~2 MiB so
    # double-buffering every stream stays inside each generation's scoped VMEM.
    itemsize = jnp.dtype(x.dtype).itemsize
    bs = min(hw_pad, max_bs)
    bs_cap = max(128, ((2 << 20) // max(1, K * itemsize)) // 128 * 128)
    bs = min(bs, bs_cap)

    grid = (N, pl.cdiv(Cout, bc), pl.cdiv(hw_pad, bs))

    w2 = w.reshape(Cout, K).astype(x.dtype)
    b2 = b.astype(jnp.float32).reshape(Cout, 1)
    g2 = gamma.astype(jnp.float32).reshape(Cout, 1)

    out = pl.pallas_call(
        _proj_ls_add_kernel,
        out_shape=jax.ShapeDtypeStruct((N, Cout, hw_pad), x.dtype),
        grid_spec=pltpu.PrefetchScalarGridSpec(
            num_scalar_prefetch=0,
            grid=grid,
            in_specs=[
                pl.BlockSpec((1, K, bs), lambda n, i, j: (n, 0, j)),   # activations
                pl.BlockSpec((bc, K), lambda n, i, j: (i, 0)),         # weights
                pl.BlockSpec((bc, 1), lambda n, i, j: (i, 0)),         # bias (f32)
                pl.BlockSpec((bc, 1), lambda n, i, j: (i, 0)),         # gamma (f32)
                pl.BlockSpec((1, bc, bs), lambda n, i, j: (n, i, j)),  # residual
            ],
            out_specs=pl.BlockSpec((1, bc, bs), lambda n, i, j: (n, i, j)),
        ),
        compiler_params=pltpu.CompilerParams(
            dimension_semantics=("parallel", "parallel", "parallel")),
    )(x3, w2, b2, g2, r3)
    if hw_pad != hw:
        out = out[:, :, :hw]
    return out.reshape(N, Cout, H, W)


# ---------------------------------------------------------------------------
# Self-test
# ---------------------------------------------------------------------------
if __name__ == "__main__":
    key = jax.random.PRNGKey(0)
    ks = jax.random.split(key, 10)

    # DiTBlock-ish sizes: batch=2, channels=32, 16x16 latent.
    N, C, H, W = 2, 32, 16, 16
    # DiT inits gamma to 0.0; use a non-trivial gamma so the test is meaningful.
    gamma = 0.1 * jax.random.normal(ks[0], (C,), jnp.float32)
    x = jax.random.normal(ks[1], (N, C, H, W), jnp.float32)
    res = jax.random.normal(ks[2], (N, C, H, W), jnp.float32)

    # 1) Standalone LayerScale (matches PyTorch x * gamma.view(1, -1, 1, 1)).
    y = jax.block_until_ready(layer_scale(x, gamma))
    y_ref = x * gamma.reshape(1, C, 1, 1)
    assert y.shape == x.shape and y.dtype == x.dtype
    assert jnp.allclose(y, y_ref, rtol=1e-5, atol=1e-5)

    # 2) Fused standalone LayerScale + residual (`self.ls1(x) + input`).
    z = jax.block_until_ready(layer_scale_add(x, gamma, res))
    z_ref = y_ref + res
    assert jnp.allclose(z, z_ref, rtol=1e-5, atol=1e-5)

    # 2b) Same with the residual aliased to the output (under jit).
    fused_alias = jax.jit(lambda a, g, r: layer_scale_add(a, g, r, alias_residual=True))
    z2 = jax.block_until_ready(fused_alias(x, gamma, res))
    assert jnp.allclose(z2, z_ref, rtol=1e-5, atol=1e-5)

    # 3) Non-128-aligned H*W (padding path) + multi-row-block grid.
    C3, H3, W3 = 96, 14, 14
    g3 = jax.random.normal(ks[3], (C3,), jnp.float32)
    x3 = jax.random.normal(ks[4], (N, C3, H3, W3), jnp.float32)
    y3 = jax.block_until_ready(layer_scale(x3, g3, max_rows=64))
    assert jnp.allclose(y3, x3 * g3.reshape(1, C3, 1, 1), rtol=1e-5, atol=1e-5)

    # 3b) gamma via modular index_map (row block divides C, no wrapper tile).
    C4 = 64
    g4 = jax.random.normal(ks[5], (C4,), jnp.float32)
    x4 = jax.random.normal(ks[6], (N, C4, 8, 16), jnp.float32)
    y4 = jax.block_until_ready(layer_scale(x4, g4, max_rows=32))
    assert jnp.allclose(y4, x4 * g4.reshape(1, C4, 1, 1), rtol=1e-5, atol=1e-5)

    # 4) bf16 activations; gamma stays f32 inside the kernel, f32 compute.
    xb, rb = x.astype(jnp.bfloat16), res.astype(jnp.bfloat16)
    zb = jax.block_until_ready(layer_scale_add(xb, gamma, rb))
    zb_ref = (xb.astype(jnp.float32) * gamma.reshape(1, C, 1, 1)
              + rb.astype(jnp.float32)).astype(jnp.bfloat16)
    assert zb.dtype == jnp.bfloat16
    assert jnp.allclose(zb.astype(jnp.float32), zb_ref.astype(jnp.float32),
                        rtol=1e-2, atol=1e-2)

    # 5) Producer-fused epilogue at the attn outProj site (K = C).
    w1 = jax.random.normal(ks[7], (C, C), jnp.float32) / jnp.sqrt(C)
    b1 = jax.random.normal(ks[8], (C,), jnp.float32)
    o1 = jax.block_until_ready(conv1x1_ls_add(x, w1, b1, gamma, res))
    o1_ref = ((jnp.einsum("ck,nkhw->nchw", w1, x,
                          precision=jax.lax.Precision.HIGHEST)
               + b1.reshape(1, C, 1, 1)) * gamma.reshape(1, C, 1, 1) + res)
    assert jnp.allclose(o1, o1_ref, rtol=2e-2, atol=2e-2)

    # 6) Producer-fused epilogue at the mlp.fc2 site (K = 4 * C -> C).
    K2 = 4 * C
    h = jax.random.normal(ks[9], (N, K2, H, W), jnp.float32)
    w2 = jax.random.normal(ks[0], (C, K2), jnp.float32) / jnp.sqrt(K2)
    b2 = jnp.zeros((C,), jnp.float32)
    o2 = jax.block_until_ready(conv1x1_ls_add(h, w2, b2, gamma, res))
    o2_ref = ((jnp.einsum("ck,nkhw->nchw", w2, h,
                          precision=jax.lax.Precision.HIGHEST)
               + b2.reshape(1, C, 1, 1)) * gamma.reshape(1, C, 1, 1) + res)
    assert jnp.allclose(o2, o2_ref, rtol=2e-2, atol=2e-2)

    print("KERNEL_OK")
</pallas_src>

<mosaic_0001>
module attributes {stable_mosaic.version = 11 : i64} {
  func.func @_ls_kernel(%arg0: i32, %arg1: i32, %arg2: memref<64x128xf32, #tpu.memory_space<vmem>>, %arg3: memref<64x1xf32, #tpu.memory_space<vmem>>, %arg4: memref<64x128xf32, #tpu.memory_space<vmem>>) attributes {dimension_semantics = [#tpu.dimension_semantics<parallel>, #tpu.dimension_semantics<parallel>], iteration_bounds = array<i64: 1, 2>, scalar_prefetch = 0 : i64, scratch_operands = 0 : i64, tpu.core_type = #tpu.core_type<tc>, window_params = [{transform_indices = @transform_0, window_bounds = array<i64: 64, 128>}, {transform_indices = @transform_1, window_bounds = array<i64: 64, 1>}, {transform_indices = @transform_2, window_bounds = array<i64: 64, 128>}]} {
    %c0 = arith.constant 0 : index
    %c0_0 = arith.constant 0 : index
    %0 = vector.load %arg2[%c0, %c0_0] : memref<64x128xf32, #tpu.memory_space<vmem>>, vector<64x128xf32>
    %c0_1 = arith.constant 0 : index
    %c0_2 = arith.constant 0 : index
    %1 = vector.load %arg3[%c0_1, %c0_2] : memref<64x1xf32, #tpu.memory_space<vmem>>, vector<64x1xf32>
    %2 = vector.broadcast %1 : vector<64x1xf32> to vector<64x128xf32>
    %3 = arith.mulf %0, %2 : vector<64x128xf32>
    %c0_3 = arith.constant 0 : index
    %c0_4 = arith.constant 0 : index
    %4 = vector.load %arg4[%c0_3, %c0_4] : memref<64x128xf32, #tpu.memory_space<vmem>>, vector<64x128xf32>
    tpu.vector_store %arg4[%c0_3, %c0_4], %3 {strides = array<i32>} : memref<64x128xf32, #tpu.memory_space<vmem>>, vector<64x128xf32>,
    return
  }
  func.func @transform_0(%arg0: i32, %arg1: i32) -> (i32, i32) {
    %c0_i32 = arith.constant 0 : i32
    return %arg0, %arg1 : i32, i32
  }
  func.func @transform_1(%arg0: i32, %arg1: i32) -> (i32, i32) {
    %c0_i32 = arith.constant 0 : i32
    %c0_i32_0 = arith.constant 0 : i32
    return %arg0, %c0_i32 : i32, i32
  }
  func.func @transform_2(%arg0: i32, %arg1: i32) -> (i32, i32) {
    %c0_i32 = arith.constant 0 : i32
    return %arg0, %arg1 : i32, i32
  }
}

</mosaic_0001>

<llo_original>
// kernel: tpu_custom_call.1
$region0: #{tpu_custom_call.1}
  #allocation0 [shape = 'u32[]', space=smem, size = 0x4, offset = 0x4, fixed_abs, tag = 'smem constant byte address 0x4 - core index']
  #allocation1 [shape = 'u32[144,128]{1,0:T(1,128)}', space=vmem, size = 0x12000, scoped, tag = 'internal scratch']
  %s0 = inlined_call_operand.hbm [shape: f32[64,256], index: 0, kind: input, shape index: {}]
  %s1 = inlined_call_operand.vmem [shape: f32[64,1], index: 1, kind: input, shape index: {}]
  %s2 = inlined_call_operand.hbm [shape: f32[64,256], index: 2, kind: output, shape index: {}]
  %s3 = sld [smem:[#allocation0]]
  $region45: #{tpu_custom_call.1} parent=0
    _
  %s5 = ssub.s32 1, %s3
  %s6 = scalar_select 0, %s5, %s3
  $region1: #{tpu_custom_call.1} parent=0
    #allocation2 [shape = 'u8[65536]{0}', space=vmem, size = 0x10000, scoped, tag = 'input window, operand 0']
    #allocation3 [shape = 's32[2]{0}', space=sflag, size = 0x8, scoped, tag = 'scoped memory for tpu_custom_call.1']
    #allocation4 [shape = 's32[2]{0}', space=sflag, size = 0x8, scoped, tag = 'scoped memory for tpu_custom_call.1']
    #allocation5 [shape = 'u8[65536]{0}', space=vmem, size = 0x10000, scoped, tag = 'output window, operand 0']
    %7 = vsyncpa [#allocation3], 0
    %s8 = scalar_lea.sflag [#allocation3], 1
    %9 = vsyncpa %s8, 0
    %10 = vsyncpa [#allocation4], 0
    %s11 = scalar_lea.sflag [#allocation4], 1
    %12 = vsyncpa %s11, 0
    loop: start=0, step=1, limit=4
    $region2: #{tpu_custom_call.1} parent=1 // loop_pre_header
      _
    $region3: #{tpu_custom_call.1} parent=1 // loop_header
      %s14 = sphi 0, %s18
      %p15 = scmp.ge.s32.totalorder %s14, 4
      %s21 = sphi 0, %s33
      %s22 = sphi 0, %s29
      %s23 = sphi 0, %s21
      %s24 = sphi 0, %s22
      %s25 = sphi 0, %s23
      %s26 = sphi 0, %s24
      %s38 = sphi 0, %s40
      %s41 = sphi 0, %s38
      %s42 = sphi 0, %s41
      %s58 = sphi 0, %s42
      %s64 = sphi 0, %s66
      %s67 = sphi 0, %s64
      %s68 = sphi 0, %s67
      %s84 = sphi 0, %s68
      %s92 = sphi 0, %s94
      %s95 = sphi 0, %s92
      %s96 = sphi 0, %s95
      %s112 = sphi 0, %s96
    $region4: #{tpu_custom_call.1} parent=1 // loop_header_branch
      %17 = sbr.rel (%p15) target = $region8
    $region5: #{tpu_custom_call.1} parent=1 // loop_body
      %s19 = ssub.s32 %s14, 1
      %s20 = ssub.s32 %s14, 2
      %s27 = sadd.s32 1, %s22
      %p28 = scmp.ge.s32.totalorder %s27, 2
      %s29 = scalar_select %p28, 0, %s27
      %s30 = sadd.s32 1, %s21
      %s31 = scalar_select %p28, %s30, %s21
      %p32 = scmp.ge.s32.totalorder %s31, 1
      %s33 = scalar_select %p32, 0, %s31
      %s34 = ssub.s32 %s21, %s33
      %s35 = ssub.s32 %s22, %s29
      %s36 = sor.u32 %s34, %s35
      %p37 = scmp.eq.s32.totalorder %s36, 0
      %s39 = sadd.s32 %s38, 1
      %s40 = scalar_select %p37, %s38, %s39
      %p43 = pneg %p37
      %p44 = scmp.eq.s32.totalorder %s14, 1
      %p45 = por %p43, %p44
      %p46 = scmp.ne.s32.totalorder %s38, %s41
      %p47 = scmp.eq.s32.totalorder %s14, 0
      %p48 = por %p46, %p47
      %p49 = scmp.ne.s32.totalorder %s38, %s41
      %p50 = scmp.eq.s32.totalorder %s19, 1
      %p51 = por %p49, %p50
      %p52 = scmp.ne.s32.totalorder %s41, %s42
      %p53 = scmp.eq.s32.totalorder %s19, 0
      %p54 = por %p52, %p53
      %p55 = scmp.ne.s32.totalorder %s41, %s42
      %p56 = scmp.eq.s32.totalorder %s20, 1
      %p57 = por %p55, %p56
      %p59 = scmp.ne.s32.totalorder %s42, %s58
      %p60 = scmp.eq.s32.totalorder %s20, 0
      %p61 = por %p59, %p60
      %s62 = ssub.s32 %s21, %s33
      %p63 = scmp.eq.s32.totalorder %s62, 0
      %s65 = sadd.s32 %s64, 1
      %s66 = scalar_select %p63, %s64, %s65
      %p69 = pneg %p63
      %p70 = scmp.eq.s32.totalorder %s14, 1
      %p71 = por %p69, %p70
      %p72 = scmp.ne.s32.totalorder %s64, %s67
      %p73 = scmp.eq.s32.totalorder %s14, 0
      %p74 = por %p72, %p73
      %p75 = scmp.ne.s32.totalorder %s64, %s67
      %p76 = scmp.eq.s32.totalorder %s19, 1
      %p77 = por %p75, %p76
      %p78 = scmp.ne.s32.totalorder %s67, %s68
      %p79 = scmp.eq.s32.totalorder %s19, 0
      %p80 = por %p78, %p79
      %p81 = scmp.ne.s32.totalorder %s67, %s68
      %p82 = scmp.eq.s32.totalorder %s20, 1
      %p83 = por %p81, %p82
      %p85 = scmp.ne.s32.totalorder %s68, %s84
      %p86 = scmp.eq.s32.totalorder %s20, 0
      %p87 = por %p85, %p86
      %s88 = ssub.s32 %s21, %s33
      %s89 = ssub.s32 %s22, %s29
      %s90 = sor.u32 %s88, %s89
      %p91 = scmp.eq.s32.totalorder %s90, 0
      %s93 = sadd.s32 %s92, 1
      %s94 = scalar_select %p91, %s92, %s93
      %p97 = pneg %p91
      %p98 = scmp.eq.s32.totalorder %s14, 1
      %p99 = por %p97, %p98
      %p100 = scmp.ne.s32.totalorder %s92, %s95
      %p101 = scmp.eq.s32.totalorder %s14, 0
      %p102 = por %p100, %p101
      %p103 = scmp.ne.s32.totalorder %s92, %s95
      %p104 = scmp.eq.s32.totalorder %s19, 1
      %p105 = por %p103, %p104
      %p106 = scmp.ne.s32.totalorder %s95, %s96
      %p107 = scmp.eq.s32.totalorder %s19, 0
      %p108 = por %p106, %p107
      %p109 = scmp.ne.s32.totalorder %s95, %s96
      %p110 = scmp.eq.s32.totalorder %s20, 1
      %p111 = por %p109, %p110
      %p113 = scmp.ne.s32.totalorder %s96, %s112
      %p114 = scmp.eq.s32.totalorder %s20, 0
      %p115 = por %p113, %p114
      %p116 = scmp.le.s32.totalorder 1, %s14
      %p117 = scmp.lt.s32.totalorder %s14, 3
      %p118 = pnand %p116, %p117
      %p119 = pneg %p118
      // Predicated region
      $region9: #{tpu_custom_call.1} parent=5 // pred_check
        _
      $region10: #{tpu_custom_call.1} parent=5 // pred_check_branch
        %121 = sbr.rel (%p118) target = $region12
      $region11: #{tpu_custom_call.1} parent=5 // pred_region
        %s122 = ssub.s32 %s14, 1
        // Predicated region
        $region13: #{tpu_custom_call.1} parent=11 // pred_check
          %p123 = pneg %p80
        $region14: #{tpu_custom_call.1} parent=11 // pred_check_branch
          %125 = sbr.rel (%p123) target = $region16
        $region15: #{tpu_custom_call.1} parent=11 // pred_region
          %s126 = smul.u32 8, %s23
          %p127 = scmp.lt.s32.totalorder %s126, 7
          %s128 = scalar_select %p127, %s126, 7
          %s129 = smul.addr %s128, 8
          %s130 = scalar_lea.vmem %s1, %s129
          %s131 = smul.u32 8, %s23
        $region16: #{tpu_custom_call.1} parent=11 // pred_fallthru
          _
      $region12: #{tpu_custom_call.1} parent=5 // pred_fallthru
        _
      %p132 = scmp.lt.s32.totalorder %s14, 2
      // Predicated region
      $region17: #{tpu_custom_call.1} parent=5 // pred_check
        %p133 = pneg %p132
      $region18: #{tpu_custom_call.1} parent=5 // pred_check_branch
        %135 = sbr.rel (%p133) target = $region20
      $region19: #{tpu_custom_call.1} parent=5 // pred_region
        // Predicated region
        $region21: #{tpu_custom_call.1} parent=19 // pred_check
          %p136 = pneg %p48
        $region22: #{tpu_custom_call.1} parent=19 // pred_check_branch
          %138 = sbr.rel (%p136) target = $region24
        $region23: #{tpu_custom_call.1} parent=19 // pred_region
          %s139 = sand.u32 %s38, 1
          %s140 = scalar_lea.sflag [#allocation3], %s139
          %s141 = sand.u32 %s38, 1
          %s142 = smul.addr %s141, 64
          %s143 = scalar_lea.vmem [#allocation2], %s142
          %s144 = smul.u32 8, %s21
          %s146 = ssub.s32 1024, 1024
          %147 = vsyncadd %s140, %s146
          %s148 = smul.addr %s144, 2
          %s149 = sadd.s32 %s22, %s148
          %s150 = smul.addr %s149, 128
          %s151 = scalar_lea.hbm %s0, %s150
          %s152 = sshll.u32 %s143, 4
          %s153 = int_to_ptr.vmem [resolvable:$true] %s152
          %158 = dma.hbm_to_vmem [thread:$0]  %s151, 1024, %s153, %s140, 256, 128, 8
        $region24: #{tpu_custom_call.1} parent=19 // pred_fallthru
          _
      $region20: #{tpu_custom_call.1} parent=5 // pred_fallthru
        _
      %p159 = scmp.le.s32.totalorder 1, %s14
      %p160 = scmp.lt.s32.totalorder %s14, 3
      %p161 = pnand %p159, %p160
      %p162 = pneg %p161
      // Predicated region
      $region25: #{tpu_custom_call.1} parent=5 // pred_check
        _
      $region26: #{tpu_custom_call.1} parent=5 // pred_check_branch
        %164 = sbr.rel (%p161) target = $region28
      $region27: #{tpu_custom_call.1} parent=5 // pred_region
        %s165 = ssub.s32 %s14, 1
        %s166 = sand.u32 %s41, 1
        %s167 = scalar_lea.sflag [#allocation3], %s166
        %s168 = sand.u32 %s41, 1
        %s169 = smul.addr %s168, 64
        %s170 = scalar_lea.vmem [#allocation2], %s169
        // Predicated region
        $region29: #{tpu_custom_call.1} parent=27 // pred_check
          %p171 = pneg %p54
        $region30: #{tpu_custom_call.1} parent=27 // pred_check_branch
          %173 = sbr.rel (%p171) target = $region32
        $region31: #{tpu_custom_call.1} parent=27 // pred_region
          %174 = dma.done %s167, 1024
        $region32: #{tpu_custom_call.1} parent=27 // pred_fallthru
          _
        %s175 = sand.u32 %s41, 1
        %s176 = scalar_lea.sflag [#allocation3], %s175
        %s177 = sand.u32 %s41, 1
        %s178 = smul.addr %s177, 64
        %s179 = scalar_lea.vmem [#allocation2], %s178
        %p180 = pneg %p54
        %p181 = pneg %p51
        %s182 = smul.u32 8, %s23
        %p183 = scmp.lt.s32.totalorder %s182, 7
        %s184 = scalar_select %p183, %s182, 7
        %s185 = smul.addr %s184, 8
        %s186 = scalar_lea.vmem %s1, %s185
        %p187 = pneg %p80
        %p188 = pneg %p77
        %p189 = pneg %p108
        %p190 = pneg %p105
        %s191 = sand.u32 %s95, 1
        %s192 = scalar_lea.sflag [#allocation4], %s191
        %s193 = sand.u32 %s95, 1
        %s194 = smul.addr %s193, 64
        %s195 = scalar_lea.vmem [#allocation5], %s194
        %s196 = smul.u32 8, %s23
        %s197 = smul.u32 8, %s23
        %p198 = scmp.lt.s32.totalorder %s197, 7
        %s199 = scalar_select %p198, %s197, 7
        %s200 = smul.addr %s199, 8
        %s201 = scalar_lea.vmem %s1, %s200
        %s202 = smul.u32 8, %s23
        %s203 = smul.u32 8, %s23
        %v204 = vld [vmem:[%s170] sm:$0xff]
        %v205 = vld [vmem:[%s170 + $0x8] sm:$0xff]
        %v206 = vld [vmem:[%s170 + $0x10] sm:$0xff]
        %v207 = vld [vmem:[%s170 + $0x18] sm:$0xff]
        %v208 = vld [vmem:[%s170 + $0x20] sm:$0xff]
        %v209 = vld [vmem:[%s170 + $0x28] sm:$0xff]
        %v210 = vld [vmem:[%s170 + $0x30] sm:$0xff]
        %v211 = vld [vmem:[%s170 + $0x38] sm:$0xff]
        %v212 = vld [vmem:[%s201] sm:$0xff]
        %v213 = vld [vmem:[%s201 + $0x8] sm:$0xff]
        %v214 = vld [vmem:[%s201 + $0x10] sm:$0xff]
        %v215 = vld [vmem:[%s201 + $0x18] sm:$0xff]
        %v216 = vld [vmem:[%s201 + $0x20] sm:$0xff]
        %v217 = vld [vmem:[%s201 + $0x28] sm:$0xff]
        %v218 = vld [vmem:[%s201 + $0x30] sm:$0xff]
        %v219 = vld [vmem:[%s201 + $0x38] sm:$0xff]
        %221 = vset.pattern.permute.xlu0 0
        %222 = vperm.xlu0 %221, %v212
        %v223 = vpop.permute.xlu0 %222
        %226 = vset.pattern.permute.xlu0 0
        %227 = vperm.xlu0 %226, %v213
        %v228 = vpop.permute.xlu0 %227
        %231 = vset.pattern.permute.xlu0 0
        %232 = vperm.xlu0 %231, %v214
        %v233 = vpop.permute.xlu0 %232
        %236 = vset.pattern.permute.xlu0 0
        %237 = vperm.xlu0 %236, %v215
        %v238 = vpop.permute.xlu0 %237
        %241 = vset.pattern.permute.xlu0 0
        %242 = vperm.xlu0 %241, %v216
        %v243 = vpop.permute.xlu0 %242
        %246 = vset.pattern.permute.xlu0 0
        %247 = vperm.xlu0 %246, %v217
        %v248 = vpop.permute.xlu0 %247
        %251 = vset.pattern.permute.xlu0 0
        %252 = vperm.xlu0 %251, %v218
        %v253 = vpop.permute.xlu0 %252
        %256 = vset.pattern.permute.xlu0 0
        %257 = vperm.xlu0 %256, %v219
        %v258 = vpop.permute.xlu0 %257
        %v260 = vmul.f32 %v204, %v223
        %v261 = vmul.f32 %v205, %v228
        %v262 = vmul.f32 %v206, %v233
        %v263 = vmul.f32 %v207, %v238
        %v264 = vmul.f32 %v208, %v243
        %v265 = vmul.f32 %v209, %v248
        %v266 = vmul.f32 %v210, %v253
        %v267 = vmul.f32 %v211, %v258
        %268 = vst [vmem:[%s195] sm:$0xff] %v260
        %269 = vst [vmem:[%s195 + $0x8] sm:$0xff] %v261
        %270 = vst [vmem:[%s195 + $0x10] sm:$0xff] %v262
        %271 = vst [vmem:[%s195 + $0x18] sm:$0xff] %v263
        %272 = vst [vmem:[%s195 + $0x20] sm:$0xff] %v264
        %273 = vst [vmem:[%s195 + $0x28] sm:$0xff] %v265
        %274 = vst [vmem:[%s195 + $0x30] sm:$0xff] %v266
        %275 = vst [vmem:[%s195 + $0x38] sm:$0xff] %v267
        %s276 = sand.u32 %s95, 1
        %s277 = scalar_lea.sflag [#allocation4], %s276
        %s278 = sand.u32 %s95, 1
        %s279 = smul.addr %s278, 64
        %s280 = scalar_lea.vmem [#allocation5], %s279
        // Predicated region
        $region33: #{tpu_custom_call.1} parent=27 // pred_check
          %p281 = pneg %p105
        $region34: #{tpu_custom_call.1} parent=27 // pred_check_branch
          %283 = sbr.rel (%p281) target = $region36
        $region35: #{tpu_custom_call.1} parent=27 // pred_region
          %s284 = smul.u32 8, %s23
          %s286 = ssub.s32 1024, 1024
          %287 = vsyncadd %s277, %s286
          %s288 = smul.addr %s284, 2
          %s289 = sadd.s32 %s24, %s288
          %s290 = smul.addr %s289, 128
          %s291 = scalar_lea.hbm %s2, %s290
          %s292 = sshll.u32 %s280, 4
          %s293 = int_to_ptr.vmem [resolvable:$true] %s292
          %298 = dma.vmem_to_hbm [thread:$0]  %s293, 1024, %s291, %s277, 128, 256, 8
        $region36: #{tpu_custom_call.1} parent=27 // pred_fallthru
          _
      $region28: #{tpu_custom_call.1} parent=5 // pred_fallthru
        _
      %p299 = scmp.le.s32.totalorder 2, %s14
      // Predicated region
      $region37: #{tpu_custom_call.1} parent=5 // pred_check
        %p300 = pneg %p299
      $region38: #{tpu_custom_call.1} parent=5 // pred_check_branch
        %302 = sbr.rel (%p300) target = $region40
      $region39: #{tpu_custom_call.1} parent=5 // pred_region
        %s303 = ssub.s32 %s14, 2
        // Predicated region
        $region41: #{tpu_custom_call.1} parent=39 // pred_check
          %p304 = pneg %p111
        $region42: #{tpu_custom_call.1} parent=39 // pred_check_branch
          %306 = sbr.rel (%p304) target = $region44
        $region43: #{tpu_custom_call.1} parent=39 // pred_region
          %s307 = sand.u32 %s96, 1
          %s308 = scalar_lea.sflag [#allocation4], %s307
          %s309 = sand.u32 %s96, 1
          %s310 = smul.addr %s309, 64
          %s311 = scalar_lea.vmem [#allocation5], %s310
          %312 = dma.done %s308, 1024
        $region44: #{tpu_custom_call.1} parent=39 // pred_fallthru
          _
      $region40: #{tpu_custom_call.1} parent=5 // pred_fallthru
        _
    $region6: #{tpu_custom_call.1} parent=1 // loop_footer
      %s18 = sadd.s32 1, %s14
    $region7: #{tpu_custom_call.1} parent=1 // loop_footer_branch
      %13 = sbr.rel target = $region3
    $region8: #{tpu_custom_call.1} parent=1 // loop_exit
      _
    %313 = vsyncpa [#allocation3], 1
    %s314 = scalar_lea.sflag [#allocation3], 1
    %315 = vsyncpa %s314, 1
    %316 = vsyncpa [#allocation4], 1
    %s317 = scalar_lea.sflag [#allocation4], 1
    %318 = vsyncpa %s317, 1

</llo_original>
